<compile_context>
chip_gen: v5e
topology: v5e:2x2
jax: 0.10.0
libtpu: 0.0.40
codegen_flags: <defaults>
</compile_context>

<pallas_src>
import jax
import jax.numpy as jnp
from jax import lax
from jax.experimental import pallas as pl
from jax.experimental.pallas import tpu as pltpu


# ---------------------------------------------------------------------------
# Fused kernel
# ---------------------------------------------------------------------------
def _mcvae_fused_kernel(x_ref, wenc_ref, wout_ref, eps_ref,
                        mu_ref, logvar_ref, z_ref, ploc_ref):
    """One fused grid step: encode + rsample + all C*C cross-decodes.

    x_ref      : (C, TN, F)    input tile, channel-major
    wenc_ref   : (C, 2L, F)    [W_mu ; W_logvar] stacked per channel
    wout_ref   : (C, F, L)     decoder weights (natural nn.Linear layout)
    eps_ref    : (C, TN, L)    N(0,1) noise for the reparameterization trick
    mu_ref     : (C, TN, L)
    logvar_ref : (C, TN, L)
    z_ref      : (C, TN, L)
    ploc_ref   : (C, C, TN, F) decoder means, [dec i][enc j][n][f] (lane-dense F)
    """
    C = x_ref.shape[0]
    L = eps_ref.shape[-1]

    # --- encode: one batched MXU contraction over F for all channels ---------
    xb = x_ref[...].astype(jnp.bfloat16)
    wencb = wenc_ref[...].astype(jnp.bfloat16)
    h = lax.dot_general(                                   # (C, TN, 2L), f32 acc
        xb, wencb,
        dimension_numbers=(((2,), (2,)), ((0,), (0,))),
        preferred_element_type=jnp.float32)
    mu = h[..., :L]
    logvar = h[..., L:]

    # --- rsample (f32 elementwise on VPU, exp on EUP) -------------------------
    z = mu + jnp.exp(0.5 * logvar) * eps_ref[...]

    mu_ref[...] = mu
    logvar_ref[...] = logvar
    z_ref[...] = z
    # TODO(synk): for very large batch, store the encoder outputs lane-dense in
    # the batch dim (layout (C, 3L, N)) to avoid masked vst on the L=8 lane dim.

    # --- decode: C*C cross-decodes, each a lane-dense (TN,L)x(L,F) dot --------
    zb = z.astype(jnp.bfloat16)
    woutb = wout_ref[...].astype(jnp.bfloat16)
    for i in range(C):          # decoder channel (static unroll, C is small)
        for j in range(C):      # encoding channel
            ploc_ref[i, j] = lax.dot_general(
                zb[j], woutb[i],
                dimension_numbers=(((1,), (1,)), ((), ())),
                preferred_element_type=jnp.float32)


# ---------------------------------------------------------------------------
# Parameter packing (one-time, hoisted out of the per-step forward)
# ---------------------------------------------------------------------------
def pack_encoder_weights(w_mu, w_logvar):
    """Pack [W_mu ; W_logvar] -> (C, 2L, F).

    Call ONCE at parameter-init time: the concat is an HBM->HBM copy of the
    encoder weights and cannot fuse into the pallas custom call, so it must not
    be paid on every forward.
    NOTE: the [w_mu ; w_logvar] order must stay in lockstep with the
    h[..., :L] / h[..., L:] split inside the kernel.
    """
    return jnp.concatenate([w_mu, w_logvar], axis=1)


# ---------------------------------------------------------------------------
# Forward wrapper
# ---------------------------------------------------------------------------
@jax.jit
def mcvae_forward(x, w_enc, w_out, w_out_logvar, eps):
    """Mcvae.forward (sparse=False), fully fused in one pallas_call.

    Returns stacked distribution parameters (instead of nested Python lists of
    torch Normals):
      q[c]    = Normal(loc=q_mu[c],     scale=exp(0.5*q_logvar[c]))
      p[i][j] = Normal(loc=p_loc[i, j], scale=p_scale[i])   (broadcast over batch)
    """
    C, N, F = x.shape
    L = eps.shape[-1]

    # Batch tile: as large as possible for dense stores / pipelining, but small
    # enough that the dominant VMEM consumer -- the double-buffered decoder
    # output tile (2 * C*C*TN*F * 4 B) plus the x tile -- stays inside the
    # scoped-VMEM default on every generation (v7x: 64 MiB phys / 32 MiB scoped).
    ploc_row_bytes = 2 * C * C * F * 4                      # double-buffered f32
    tn_cap = max(8, ((8 * 1024 * 1024) // ploc_row_bytes) // 8 * 8)
    block_n = N if N <= tn_cap else tn_cap
    grid = (pl.cdiv(N, block_n),)

    flops = 2 * C * N * F * (2 * L) + 2 * C * C * N * L * F
    bytes_accessed = 4 * (x.size + w_enc.size + w_out.size + eps.size
                          + 3 * C * N * L + C * C * N * F)

    grid_spec = pltpu.PrefetchScalarGridSpec(
        num_scalar_prefetch=0,
        grid=grid,
        in_specs=[
            pl.BlockSpec((C, block_n, F), lambda n: (0, n, 0)),
            pl.BlockSpec((C, 2 * L, F), lambda n: (0, 0, 0)),   # grid-invariant
            pl.BlockSpec((C, F, L), lambda n: (0, 0, 0)),       # grid-invariant
            pl.BlockSpec((C, block_n, L), lambda n: (0, n, 0)),
        ],
        out_specs=[
            pl.BlockSpec((C, block_n, L), lambda n: (0, n, 0)),
            pl.BlockSpec((C, block_n, L), lambda n: (0, n, 0)),
            pl.BlockSpec((C, block_n, L), lambda n: (0, n, 0)),
            pl.BlockSpec((C, C, block_n, F), lambda n: (0, 0, n, 0)),
        ],
    )

    q_mu, q_logvar, z, p_loc = pl.pallas_call(
        _mcvae_fused_kernel,
        out_shape=(
            jax.ShapeDtypeStruct((C, N, L), jnp.float32),
            jax.ShapeDtypeStruct((C, N, L), jnp.float32),
            jax.ShapeDtypeStruct((C, N, L), jnp.float32),
            jax.ShapeDtypeStruct((C, C, N, F), jnp.float32),
        ),
        grid_spec=grid_spec,
        compiler_params=pltpu.CompilerParams(
            dimension_semantics=("parallel",)),
        cost_estimate=pl.CostEstimate(
            flops=flops,
            transcendentals=C * N * L,
            bytes_accessed=bytes_accessed),
    )(x, w_enc, w_out, eps)

    p_scale = jnp.exp(0.5 * w_out_logvar)                   # (C, 1, F)
    return {"x": x, "q_mu": q_mu, "q_logvar": q_logvar, "z": z,
            "p_loc": p_loc, "p_scale": p_scale}


# ---------------------------------------------------------------------------
# Main
# ---------------------------------------------------------------------------
if __name__ == "__main__":
    # Shapes consistent with Mcvae(lat_dim=8, n_channels=3, n_feats=(128,)*3), batch 8.
    C, N, F, L = 3, 8, 128, 8
    NOISE_INIT_LOGVAR = -3.0

    key = jax.random.PRNGKey(0)
    kx, kmu, klv, kout, keps = jax.random.split(key, 5)

    x = jax.random.normal(kx, (C, N, F), dtype=jnp.float32)
    # torch.nn.Linear(F, L, bias=False).weight -> [L, F]
    w_mu = 0.05 * jax.random.normal(kmu, (C, L, F), dtype=jnp.float32)
    w_logvar = 0.05 * jax.random.normal(klv, (C, L, F), dtype=jnp.float32)
    # torch.nn.Linear(L, F, bias=False).weight -> [F, L]
    w_out = 0.05 * jax.random.normal(kout, (C, F, L), dtype=jnp.float32)
    # torch.nn.Parameter(torch.FloatTensor(1, F).fill_(noise_init_logvar))
    w_out_logvar = jnp.full((C, 1, F), NOISE_INIT_LOGVAR, dtype=jnp.float32)
    eps = jax.random.normal(keps, (C, N, L), dtype=jnp.float32)

    # One-time parameter packing, hoisted out of the per-step forward.
    w_enc = pack_encoder_weights(w_mu, w_logvar)

    # TODO(synk): sparse=True path (logvar derived from the shared log_alpha via
    # compute_logvar) is not implemented; this reproduces the default
    # sparse=False forward.

    out = mcvae_forward(x, w_enc, w_out, w_out_logvar, eps)
    jax.block_until_ready(out["p_loc"])

    # Pure-JAX reference mirroring the kernel's bf16-operand / f32-accumulate dots.
    xb = x.astype(jnp.bfloat16)
    wmub = w_mu.astype(jnp.bfloat16)
    wlvb = w_logvar.astype(jnp.bfloat16)
    mu_ref = jnp.einsum("cnf,clf->cnl", xb, wmub,
                        preferred_element_type=jnp.float32)
    lv_ref = jnp.einsum("cnf,clf->cnl", xb, wlvb,
                        preferred_element_type=jnp.float32)
    z_ref = mu_ref + jnp.exp(0.5 * lv_ref) * eps
    ploc_ref = jnp.einsum("jnl,ifl->ijnf", z_ref.astype(jnp.bfloat16),
                          w_out.astype(jnp.bfloat16),
                          preferred_element_type=jnp.float32)
    pscale_ref = jnp.exp(0.5 * w_out_logvar)

    assert jnp.allclose(out["q_mu"], mu_ref, atol=2e-3, rtol=2e-3)
    assert jnp.allclose(out["q_logvar"], lv_ref, atol=2e-3, rtol=2e-3)
    assert jnp.allclose(out["z"], z_ref, atol=2e-3, rtol=2e-3)
    assert jnp.allclose(out["p_loc"], ploc_ref, atol=2e-3, rtol=2e-3)
    assert jnp.allclose(out["p_scale"], pscale_ref, atol=1e-6, rtol=1e-6)

    print("KERNEL_OK")
</pallas_src>

<mosaic_0001>
module attributes {stable_mosaic.version = 11 : i64} {
  func.func @_mcvae_fused_kernel(%arg0: i32, %arg1: memref<3x8x128xf32, #tpu.memory_space<vmem>>, %arg2: memref<3x16x128xf32, #tpu.memory_space<vmem>>, %arg3: memref<3x128x8xf32, #tpu.memory_space<vmem>>, %arg4: memref<3x8x8xf32, #tpu.memory_space<vmem>>, %arg5: memref<3x8x8xf32, #tpu.memory_space<vmem>>, %arg6: memref<3x8x8xf32, #tpu.memory_space<vmem>>, %arg7: memref<3x8x8xf32, #tpu.memory_space<vmem>>, %arg8: memref<3x3x8x128xf32, #tpu.memory_space<vmem>>) attributes {dimension_semantics = [#tpu.dimension_semantics<parallel>], iteration_bounds = array<i64: 1>, scalar_prefetch = 0 : i64, scratch_operands = 0 : i64, tpu.core_type = #tpu.core_type<tc>, window_params = [{transform_indices = @transform_0, window_bounds = array<i64: 3, 8, 128>}, {pipeline_mode = #tpu.pipeline_mode<synchronous>, transform_indices = @transform_1, window_bounds = array<i64: 3, 16, 128>}, {pipeline_mode = #tpu.pipeline_mode<synchronous>, transform_indices = @transform_2, window_bounds = array<i64: 3, 128, 8>}, {transform_indices = @transform_3, window_bounds = array<i64: 3, 8, 8>}, {transform_indices = @transform_4, window_bounds = array<i64: 3, 8, 8>}, {transform_indices = @transform_5, window_bounds = array<i64: 3, 8, 8>}, {transform_indices = @transform_6, window_bounds = array<i64: 3, 8, 8>}, {transform_indices = @transform_7, window_bounds = array<i64: 3, 3, 8, 128>}]} {
    %c0 = arith.constant 0 : index
    %c0_0 = arith.constant 0 : index
    %c0_1 = arith.constant 0 : index
    %0 = vector.load %arg1[%c0, %c0_0, %c0_1] : memref<3x8x128xf32, #tpu.memory_space<vmem>>, vector<3x8x128xf32>
    %1 = arith.truncf %0 : vector<3x8x128xf32> to vector<3x8x128xbf16>
    %c0_2 = arith.constant 0 : index
    %c0_3 = arith.constant 0 : index
    %c0_4 = arith.constant 0 : index
    %2 = vector.load %arg2[%c0_2, %c0_3, %c0_4] : memref<3x16x128xf32, #tpu.memory_space<vmem>>, vector<3x16x128xf32>
    %3 = arith.truncf %2 : vector<3x16x128xf32> to vector<3x16x128xbf16>
    %cst = arith.constant dense<0.000000e+00> : vector<3x8x16xf32>
    %4 = tpu.matmul %1, %3, %cst {dimension_numbers = #tpu.dot_dimension_numbers<[2], [2], [1], [1], [0, 0, 0, 1, 1, 1], [0], [0]>} : vector<3x8x128xbf16>, vector<3x16x128xbf16>, vector<3x8x16xf32> -> vector<3x8x16xf32>
    %5 = vector.extract_strided_slice %4 {offsets = [0, 0, 0], sizes = [3, 8, 8], strides = [1, 1, 1]} : vector<3x8x16xf32> to vector<3x8x8xf32>
    %6 = vector.extract_strided_slice %4 {offsets = [0, 0, 8], sizes = [3, 8, 8], strides = [1, 1, 1]} : vector<3x8x16xf32> to vector<3x8x8xf32>
    %cst_5 = arith.constant 5.000000e-01 : f32
    %7 = vector.broadcast %cst_5 : f32 to vector<3x8x8xf32>
    %8 = arith.mulf %7, %6 : vector<3x8x8xf32>
    %9 = math.exp %8 : vector<3x8x8xf32>
    %c0_6 = arith.constant 0 : index
    %c0_7 = arith.constant 0 : index
    %c0_8 = arith.constant 0 : index
    %10 = vector.load %arg4[%c0_6, %c0_7, %c0_8] : memref<3x8x8xf32, #tpu.memory_space<vmem>>, vector<3x8x8xf32>
    %11 = arith.mulf %9, %10 : vector<3x8x8xf32>
    %12 = arith.addf %5, %11 : vector<3x8x8xf32>
    %c0_9 = arith.constant 0 : index
    %c0_10 = arith.constant 0 : index
    %c0_11 = arith.constant 0 : index
    %13 = vector.load %arg5[%c0_9, %c0_10, %c0_11] : memref<3x8x8xf32, #tpu.memory_space<vmem>>, vector<3x8x8xf32>
    tpu.vector_store %arg5[%c0_9, %c0_10, %c0_11], %5 {strides = array<i32>} : memref<3x8x8xf32, #tpu.memory_space<vmem>>, vector<3x8x8xf32>,
    %c0_12 = arith.constant 0 : index
    %c0_13 = arith.constant 0 : index
    %c0_14 = arith.constant 0 : index
    %14 = vector.load %arg6[%c0_12, %c0_13, %c0_14] : memref<3x8x8xf32, #tpu.memory_space<vmem>>, vector<3x8x8xf32>
    tpu.vector_store %arg6[%c0_12, %c0_13, %c0_14], %6 {strides = array<i32>} : memref<3x8x8xf32, #tpu.memory_space<vmem>>, vector<3x8x8xf32>,
    %c0_15 = arith.constant 0 : index
    %c0_16 = arith.constant 0 : index
    %c0_17 = arith.constant 0 : index
    %15 = vector.load %arg7[%c0_15, %c0_16, %c0_17] : memref<3x8x8xf32, #tpu.memory_space<vmem>>, vector<3x8x8xf32>
    tpu.vector_store %arg7[%c0_15, %c0_16, %c0_17], %12 {strides = array<i32>} : memref<3x8x8xf32, #tpu.memory_space<vmem>>, vector<3x8x8xf32>,
    %16 = arith.truncf %12 : vector<3x8x8xf32> to vector<3x8x8xbf16>
    %c0_18 = arith.constant 0 : index
    %c0_19 = arith.constant 0 : index
    %c0_20 = arith.constant 0 : index
    %17 = vector.load %arg3[%c0_18, %c0_19, %c0_20] : memref<3x128x8xf32, #tpu.memory_space<vmem>>, vector<3x128x8xf32>
    %18 = arith.truncf %17 : vector<3x128x8xf32> to vector<3x128x8xbf16>
    %19 = vector.extract_strided_slice %16 {offsets = [0, 0, 0], sizes = [1, 8, 8], strides = [1, 1, 1]} : vector<3x8x8xbf16> to vector<1x8x8xbf16>
    %20 = vector.shape_cast %19 : vector<1x8x8xbf16> to vector<8x8xbf16>
    %21 = vector.extract_strided_slice %18 {offsets = [0, 0, 0], sizes = [1, 128, 8], strides = [1, 1, 1]} : vector<3x128x8xbf16> to vector<1x128x8xbf16>
    %22 = vector.shape_cast %21 : vector<1x128x8xbf16> to vector<128x8xbf16>
    %cst_21 = arith.constant dense<0.000000e+00> : vector<8x128xf32>
    %23 = tpu.matmul %20, %22, %cst_21 {dimension_numbers = #tpu.dot_dimension_numbers<[1], [1], [0], [0], [0, 0, 1, 0], [], []>} : vector<8x8xbf16>, vector<128x8xbf16>, vector<8x128xf32> -> vector<8x128xf32>
    %c0_22 = arith.constant 0 : index
    %c0_23 = arith.constant 0 : index
    %c0_24 = arith.constant 0 : index
    %c0_25 = arith.constant 0 : index
    %24 = vector.load %arg8[%c0_22, %c0_23, %c0_24, %c0_25] : memref<3x3x8x128xf32, #tpu.memory_space<vmem>>, vector<1x1x8x128xf32>
    %25 = vector.shape_cast %24 : vector<1x1x8x128xf32> to vector<8x128xf32>
    %26 = vector.shape_cast %23 : vector<8x128xf32> to vector<1x1x8x128xf32>
    tpu.vector_store %arg8[%c0_22, %c0_23, %c0_24, %c0_25], %26 {strides = array<i32>} : memref<3x3x8x128xf32, #tpu.memory_space<vmem>>, vector<1x1x8x128xf32>,
    %27 = vector.extract_strided_slice %16 {offsets = [1, 0, 0], sizes = [1, 8, 8], strides = [1, 1, 1]} : vector<3x8x8xbf16> to vector<1x8x8xbf16>
    %28 = vector.shape_cast %27 : vector<1x8x8xbf16> to vector<8x8xbf16>
    %29 = vector.extract_strided_slice %18 {offsets = [0, 0, 0], sizes = [1, 128, 8], strides = [1, 1, 1]} : vector<3x128x8xbf16> to vector<1x128x8xbf16>
    %30 = vector.shape_cast %29 : vector<1x128x8xbf16> to vector<128x8xbf16>
    %cst_26 = arith.constant dense<0.000000e+00> : vector<8x128xf32>
    %31 = tpu.matmul %28, %30, %cst_26 {dimension_numbers = #tpu.dot_dimension_numbers<[1], [1], [0], [0], [0, 0, 1, 0], [], []>} : vector<8x8xbf16>, vector<128x8xbf16>, vector<8x128xf32> -> vector<8x128xf32>
    %c0_27 = arith.constant 0 : index
    %c1 = arith.constant 1 : index
    %c0_28 = arith.constant 0 : index
    %c0_29 = arith.constant 0 : index
    %32 = vector.load %arg8[%c0_27, %c1, %c0_28, %c0_29] : memref<3x3x8x128xf32, #tpu.memory_space<vmem>>, vector<1x1x8x128xf32>
    %33 = vector.shape_cast %32 : vector<1x1x8x128xf32> to vector<8x128xf32>
    %34 = vector.shape_cast %31 : vector<8x128xf32> to vector<1x1x8x128xf32>
    tpu.vector_store %arg8[%c0_27, %c1, %c0_28, %c0_29], %34 {strides = array<i32>} : memref<3x3x8x128xf32, #tpu.memory_space<vmem>>, vector<1x1x8x128xf32>,
    %35 = vector.extract_strided_slice %16 {offsets = [2, 0, 0], sizes = [1, 8, 8], strides = [1, 1, 1]} : vector<3x8x8xbf16> to vector<1x8x8xbf16>
    %36 = vector.shape_cast %35 : vector<1x8x8xbf16> to vector<8x8xbf16>
    %37 = vector.extract_strided_slice %18 {offsets = [0, 0, 0], sizes = [1, 128, 8], strides = [1, 1, 1]} : vector<3x128x8xbf16> to vector<1x128x8xbf16>
    %38 = vector.shape_cast %37 : vector<1x128x8xbf16> to vector<128x8xbf16>
    %cst_30 = arith.constant dense<0.000000e+00> : vector<8x128xf32>
    %39 = tpu.matmul %36, %38, %cst_30 {dimension_numbers = #tpu.dot_dimension_numbers<[1], [1], [0], [0], [0, 0, 1, 0], [], []>} : vector<8x8xbf16>, vector<128x8xbf16>, vector<8x128xf32> -> vector<8x128xf32>
    %c0_31 = arith.constant 0 : index
    %c2 = arith.constant 2 : index
    %c0_32 = arith.constant 0 : index
    %c0_33 = arith.constant 0 : index
    %40 = vector.load %arg8[%c0_31, %c2, %c0_32, %c0_33] : memref<3x3x8x128xf32, #tpu.memory_space<vmem>>, vector<1x1x8x128xf32>
    %41 = vector.shape_cast %40 : vector<1x1x8x128xf32> to vector<8x128xf32>
    %42 = vector.shape_cast %39 : vector<8x128xf32> to vector<1x1x8x128xf32>
    tpu.vector_store %arg8[%c0_31, %c2, %c0_32, %c0_33], %42 {strides = array<i32>} : memref<3x3x8x128xf32, #tpu.memory_space<vmem>>, vector<1x1x8x128xf32>,
    %43 = vector.extract_strided_slice %16 {offsets = [0, 0, 0], sizes = [1, 8, 8], strides = [1, 1, 1]} : vector<3x8x8xbf16> to vector<1x8x8xbf16>
    %44 = vector.shape_cast %43 : vector<1x8x8xbf16> to vector<8x8xbf16>
    %45 = vector.extract_strided_slice %18 {offsets = [1, 0, 0], sizes = [1, 128, 8], strides = [1, 1, 1]} : vector<3x128x8xbf16> to vector<1x128x8xbf16>
    %46 = vector.shape_cast %45 : vector<1x128x8xbf16> to vector<128x8xbf16>
    %cst_34 = arith.constant dense<0.000000e+00> : vector<8x128xf32>
    %47 = tpu.matmul %44, %46, %cst_34 {dimension_numbers = #tpu.dot_dimension_numbers<[1], [1], [0], [0], [0, 0, 1, 0], [], []>} : vector<8x8xbf16>, vector<128x8xbf16>, vector<8x128xf32> -> vector<8x128xf32>
    %c1_35 = arith.constant 1 : index
    %c0_36 = arith.constant 0 : index
    %c0_37 = arith.constant 0 : index
    %c0_38 = arith.constant 0 : index
    %48 = vector.load %arg8[%c1_35, %c0_36, %c0_37, %c0_38] : memref<3x3x8x128xf32, #tpu.memory_space<vmem>>, vector<1x1x8x128xf32>
    %49 = vector.shape_cast %48 : vector<1x1x8x128xf32> to vector<8x128xf32>
    %50 = vector.shape_cast %47 : vector<8x128xf32> to vector<1x1x8x128xf32>
    tpu.vector_store %arg8[%c1_35, %c0_36, %c0_37, %c0_38], %50 {strides = array<i32>} : memref<3x3x8x128xf32, #tpu.memory_space<vmem>>, vector<1x1x8x128xf32>,
    %51 = vector.extract_strided_slice %16 {offsets = [1, 0, 0], sizes = [1, 8, 8], strides = [1, 1, 1]} : vector<3x8x8xbf16> to vector<1x8x8xbf16>
    %52 = vector.shape_cast %51 : vector<1x8x8xbf16> to vector<8x8xbf16>
    %53 = vector.extract_strided_slice %18 {offsets = [1, 0, 0], sizes = [1, 128, 8], strides = [1, 1, 1]} : vector<3x128x8xbf16> to vector<1x128x8xbf16>
    %54 = vector.shape_cast %53 : vector<1x128x8xbf16> to vector<128x8xbf16>
    %cst_39 = arith.constant dense<0.000000e+00> : vector<8x128xf32>
    %55 = tpu.matmul %52, %54, %cst_39 {dimension_numbers = #tpu.dot_dimension_numbers<[1], [1], [0], [0], [0, 0, 1, 0], [], []>} : vector<8x8xbf16>, vector<128x8xbf16>, vector<8x128xf32> -> vector<8x128xf32>
    %c1_40 = arith.constant 1 : index
    %c1_41 = arith.constant 1 : index
    %c0_42 = arith.constant 0 : index
    %c0_43 = arith.constant 0 : index
    %56 = vector.load %arg8[%c1_40, %c1_41, %c0_42, %c0_43] : memref<3x3x8x128xf32, #tpu.memory_space<vmem>>, vector<1x1x8x128xf32>
    %57 = vector.shape_cast %56 : vector<1x1x8x128xf32> to vector<8x128xf32>
    %58 = vector.shape_cast %55 : vector<8x128xf32> to vector<1x1x8x128xf32>
    tpu.vector_store %arg8[%c1_40, %c1_41, %c0_42, %c0_43], %58 {strides = array<i32>} : memref<3x3x8x128xf32, #tpu.memory_space<vmem>>, vector<1x1x8x128xf32>,
    %59 = vector.extract_strided_slice %16 {offsets = [2, 0, 0], sizes = [1, 8, 8], strides = [1, 1, 1]} : vector<3x8x8xbf16> to vector<1x8x8xbf16>
    %60 = vector.shape_cast %59 : vector<1x8x8xbf16> to vector<8x8xbf16>
    %61 = vector.extract_strided_slice %18 {offsets = [1, 0, 0], sizes = [1, 128, 8], strides = [1, 1, 1]} : vector<3x128x8xbf16> to vector<1x128x8xbf16>
    %62 = vector.shape_cast %61 : vector<1x128x8xbf16> to vector<128x8xbf16>
    %cst_44 = arith.constant dense<0.000000e+00> : vector<8x128xf32>
    %63 = tpu.matmul %60, %62, %cst_44 {dimension_numbers = #tpu.dot_dimension_numbers<[1], [1], [0], [0], [0, 0, 1, 0], [], []>} : vector<8x8xbf16>, vector<128x8xbf16>, vector<8x128xf32> -> vector<8x128xf32>
    %c1_45 = arith.constant 1 : index
    %c2_46 = arith.constant 2 : index
    %c0_47 = arith.constant 0 : index
    %c0_48 = arith.constant 0 : index
    %64 = vector.load %arg8[%c1_45, %c2_46, %c0_47, %c0_48] : memref<3x3x8x128xf32, #tpu.memory_space<vmem>>, vector<1x1x8x128xf32>
    %65 = vector.shape_cast %64 : vector<1x1x8x128xf32> to vector<8x128xf32>
    %66 = vector.shape_cast %63 : vector<8x128xf32> to vector<1x1x8x128xf32>
    tpu.vector_store %arg8[%c1_45, %c2_46, %c0_47, %c0_48], %66 {strides = array<i32>} : memref<3x3x8x128xf32, #tpu.memory_space<vmem>>, vector<1x1x8x128xf32>,
    %67 = vector.extract_strided_slice %16 {offsets = [0, 0, 0], sizes = [1, 8, 8], strides = [1, 1, 1]} : vector<3x8x8xbf16> to vector<1x8x8xbf16>
    %68 = vector.shape_cast %67 : vector<1x8x8xbf16> to vector<8x8xbf16>
    %69 = vector.extract_strided_slice %18 {offsets = [2, 0, 0], sizes = [1, 128, 8], strides = [1, 1, 1]} : vector<3x128x8xbf16> to vector<1x128x8xbf16>
    %70 = vector.shape_cast %69 : vector<1x128x8xbf16> to vector<128x8xbf16>
    %cst_49 = arith.constant dense<0.000000e+00> : vector<8x128xf32>
    %71 = tpu.matmul %68, %70, %cst_49 {dimension_numbers = #tpu.dot_dimension_numbers<[1], [1], [0], [0], [0, 0, 1, 0], [], []>} : vector<8x8xbf16>, vector<128x8xbf16>, vector<8x128xf32> -> vector<8x128xf32>
    %c2_50 = arith.constant 2 : index
    %c0_51 = arith.constant 0 : index
    %c0_52 = arith.constant 0 : index
    %c0_53 = arith.constant 0 : index
    %72 = vector.load %arg8[%c2_50, %c0_51, %c0_52, %c0_53] : memref<3x3x8x128xf32, #tpu.memory_space<vmem>>, vector<1x1x8x128xf32>
    %73 = vector.shape_cast %72 : vector<1x1x8x128xf32> to vector<8x128xf32>
    %74 = vector.shape_cast %71 : vector<8x128xf32> to vector<1x1x8x128xf32>
    tpu.vector_store %arg8[%c2_50, %c0_51, %c0_52, %c0_53], %74 {strides = array<i32>} : memref<3x3x8x128xf32, #tpu.memory_space<vmem>>, vector<1x1x8x128xf32>,
    %75 = vector.extract_strided_slice %16 {offsets = [1, 0, 0], sizes = [1, 8, 8], strides = [1, 1, 1]} : vector<3x8x8xbf16> to vector<1x8x8xbf16>
    %76 = vector.shape_cast %75 : vector<1x8x8xbf16> to vector<8x8xbf16>
    %77 = vector.extract_strided_slice %18 {offsets = [2, 0, 0], sizes = [1, 128, 8], strides = [1, 1, 1]} : vector<3x128x8xbf16> to vector<1x128x8xbf16>
    %78 = vector.shape_cast %77 : vector<1x128x8xbf16> to vector<128x8xbf16>
    %cst_54 = arith.constant dense<0.000000e+00> : vector<8x128xf32>
    %79 = tpu.matmul %76, %78, %cst_54 {dimension_numbers = #tpu.dot_dimension_numbers<[1], [1], [0], [0], [0, 0, 1, 0], [], []>} : vector<8x8xbf16>, vector<128x8xbf16>, vector<8x128xf32> -> vector<8x128xf32>
    %c2_55 = arith.constant 2 : index
    %c1_56 = arith.constant 1 : index
    %c0_57 = arith.constant 0 : index
    %c0_58 = arith.constant 0 : index
    %80 = vector.load %arg8[%c2_55, %c1_56, %c0_57, %c0_58] : memref<3x3x8x128xf32, #tpu.memory_space<vmem>>, vector<1x1x8x128xf32>
    %81 = vector.shape_cast %80 : vector<1x1x8x128xf32> to vector<8x128xf32>
    %82 = vector.shape_cast %79 : vector<8x128xf32> to vector<1x1x8x128xf32>
    tpu.vector_store %arg8[%c2_55, %c1_56, %c0_57, %c0_58], %82 {strides = array<i32>} : memref<3x3x8x128xf32, #tpu.memory_space<vmem>>, vector<1x1x8x128xf32>,
    %83 = vector.extract_strided_slice %16 {offsets = [2, 0, 0], sizes = [1, 8, 8], strides = [1, 1, 1]} : vector<3x8x8xbf16> to vector<1x8x8xbf16>
    %84 = vector.shape_cast %83 : vector<1x8x8xbf16> to vector<8x8xbf16>
    %85 = vector.extract_strided_slice %18 {offsets = [2, 0, 0], sizes = [1, 128, 8], strides = [1, 1, 1]} : vector<3x128x8xbf16> to vector<1x128x8xbf16>
    %86 = vector.shape_cast %85 : vector<1x128x8xbf16> to vector<128x8xbf16>
    %cst_59 = arith.constant dense<0.000000e+00> : vector<8x128xf32>
    %87 = tpu.matmul %84, %86, %cst_59 {dimension_numbers = #tpu.dot_dimension_numbers<[1], [1], [0], [0], [0, 0, 1, 0], [], []>} : vector<8x8xbf16>, vector<128x8xbf16>, vector<8x128xf32> -> vector<8x128xf32>
    %c2_60 = arith.constant 2 : index
    %c2_61 = arith.constant 2 : index
    %c0_62 = arith.constant 0 : index
    %c0_63 = arith.constant 0 : index
    %88 = vector.load %arg8[%c2_60, %c2_61, %c0_62, %c0_63] : memref<3x3x8x128xf32, #tpu.memory_space<vmem>>, vector<1x1x8x128xf32>
    %89 = vector.shape_cast %88 : vector<1x1x8x128xf32> to vector<8x128xf32>
    %90 = vector.shape_cast %87 : vector<8x128xf32> to vector<1x1x8x128xf32>
    tpu.vector_store %arg8[%c2_60, %c2_61, %c0_62, %c0_63], %90 {strides = array<i32>} : memref<3x3x8x128xf32, #tpu.memory_space<vmem>>, vector<1x1x8x128xf32>,
    return
  }
  func.func @transform_0(%arg0: i32) -> (i32, i32, i32) {
    %c0_i32 = arith.constant 0 : i32
    %c0_i32_0 = arith.constant 0 : i32
    %c0_i32_1 = arith.constant 0 : i32
    return %c0_i32, %arg0, %c0_i32_0 : i32, i32, i32
  }
  func.func @transform_1(%arg0: i32) -> (i32, i32, i32) {
    %c0_i32 = arith.constant 0 : i32
    %c0_i32_0 = arith.constant 0 : i32
    %c0_i32_1 = arith.constant 0 : i32
    %c0_i32_2 = arith.constant 0 : i32
    return %c0_i32, %c0_i32_0, %c0_i32_1 : i32, i32, i32
  }
  func.func @transform_2(%arg0: i32) -> (i32, i32, i32) {
    %c0_i32 = arith.constant 0 : i32
    %c0_i32_0 = arith.constant 0 : i32
    %c0_i32_1 = arith.constant 0 : i32
    %c0_i32_2 = arith.constant 0 : i32
    return %c0_i32, %c0_i32_0, %c0_i32_1 : i32, i32, i32
  }
  func.func @transform_3(%arg0: i32) -> (i32, i32, i32) {
    %c0_i32 = arith.constant 0 : i32
    %c0_i32_0 = arith.constant 0 : i32
    %c0_i32_1 = arith.constant 0 : i32
    return %c0_i32, %arg0, %c0_i32_0 : i32, i32, i32
  }
  func.func @transform_4(%arg0: i32) -> (i32, i32, i32) {
    %c0_i32 = arith.constant 0 : i32
    %c0_i32_0 = arith.constant 0 : i32
    %c0_i32_1 = arith.constant 0 : i32
    return %c0_i32, %arg0, %c0_i32_0 : i32, i32, i32
  }
  func.func @transform_5(%arg0: i32) -> (i32, i32, i32) {
    %c0_i32 = arith.constant 0 : i32
    %c0_i32_0 = arith.constant 0 : i32
    %c0_i32_1 = arith.constant 0 : i32
    return %c0_i32, %arg0, %c0_i32_0 : i32, i32, i32
  }
  func.func @transform_6(%arg0: i32) -> (i32, i32, i32) {
    %c0_i32 = arith.constant 0 : i32
    %c0_i32_0 = arith.constant 0 : i32
    %c0_i32_1 = arith.constant 0 : i32
    return %c0_i32, %arg0, %c0_i32_0 : i32, i32, i32
  }
  func.func @transform_7(%arg0: i32) -> (i32, i32, i32, i32) {
    %c0_i32 = arith.constant 0 : i32
    %c0_i32_0 = arith.constant 0 : i32
    %c0_i32_1 = arith.constant 0 : i32
    %c0_i32_2 = arith.constant 0 : i32
    return %c0_i32, %c0_i32_0, %arg0, %c0_i32_1 : i32, i32, i32, i32
  }
}

</mosaic_0001>

<llo_original>
// kernel: mcvae_forward.1
$region0: #{mcvae_forward.1}
  #allocation0 [shape = 'u32[]', space=smem, size = 0x4, offset = 0x4, fixed_abs, tag = 'smem constant byte address 0x4 - core index']
  #allocation1 [shape = 'u32[72,128]{1,0:T(1,128)}', space=vmem, size = 0x9000, scoped, tag = 'internal scratch']
  %s0 = inlined_call_operand.vmem [shape: f32[3,8,128], index: 0, kind: input, shape index: {}]
  %s1 = inlined_call_operand.vmem [shape: f32[3,16,128], index: 1, kind: input, shape index: {}]
  %s2 = inlined_call_operand.vmem [shape: f32[3,128,8], index: 2, kind: input, shape index: {}]
  %s3 = inlined_call_operand.vmem [shape: f32[3,8,8], index: 3, kind: input, shape index: {}]
  %s4 = inlined_call_operand.hbm [shape: f32[3,8,8], index: 4, kind: output, shape index: {0}]
  %s5 = inlined_call_operand.hbm [shape: f32[3,8,8], index: 5, kind: output, shape index: {1}]
  %s6 = inlined_call_operand.hbm [shape: f32[3,8,8], index: 6, kind: output, shape index: {2}]
  %s7 = inlined_call_operand.hbm [shape: f32[3,3,8,128], index: 7, kind: output, shape index: {3}]
  %8 = xla_tuple %s4, %s5, %s6, %s7
  %s9 = sld [smem:[#allocation0]]
  $region50: #{mcvae_forward.1} parent=0
    _
  %s11 = ssub.s32 1, %s9
  %s12 = scalar_select 0, %s11, %s9
  $region1: #{mcvae_forward.1} parent=0
    #allocation2 [shape = 'u8[12288]{0}', space=vmem, size = 0x3000, scoped, tag = 'output window, operand 0, single buffered']
    #allocation3 [shape = 's32[1]{0}', space=sflag, size = 0x4, scoped, tag = 'scoped memory for mcvae_forward.1']
    #allocation4 [shape = 'u8[12288]{0}', space=vmem, size = 0x3000, scoped, tag = 'output window, operand 1, single buffered']
    #allocation5 [shape = 's32[1]{0}', space=sflag, size = 0x4, scoped, tag = 'scoped memory for mcvae_forward.1']
    #allocation6 [shape = 'u8[12288]{0}', space=vmem, size = 0x3000, scoped, tag = 'output window, operand 2, single buffered']
    #allocation7 [shape = 'u8[36864]{0}', space=vmem, size = 0x9000, scoped, tag = 'output window, operand 3, single buffered']
    #allocation8 [shape = 's32[1]{0}', space=sflag, size = 0x4, scoped, tag = 'scoped memory for mcvae_forward.1']
    %13 = vsyncpa [#allocation3], 0
    %14 = vsyncpa [#allocation5], 0
    %15 = vsyncpa [#allocation8], 0
    // Predicated region
    $region2: #{mcvae_forward.1} parent=1 // pred_check
      _
    $region3: #{mcvae_forward.1} parent=1 // pred_check_branch
      %17 = sbr.rel (0) target = $region5
    $region4: #{mcvae_forward.1} parent=1 // pred_region
      _
    $region5: #{mcvae_forward.1} parent=1 // pred_fallthru
      _
    // Predicated region
    $region6: #{mcvae_forward.1} parent=1 // pred_check
      _
    $region7: #{mcvae_forward.1} parent=1 // pred_check_branch
      %19 = sbr.rel (0) target = $region9
    $region8: #{mcvae_forward.1} parent=1 // pred_region
      _
    $region9: #{mcvae_forward.1} parent=1 // pred_fallthru
      _
    // Predicated region
    $region10: #{mcvae_forward.1} parent=1 // pred_check
      _
    $region11: #{mcvae_forward.1} parent=1 // pred_check_branch
      %21 = sbr.rel (0) target = $region13
    $region12: #{mcvae_forward.1} parent=1 // pred_region
      _
    $region13: #{mcvae_forward.1} parent=1 // pred_fallthru
      _
    // Predicated region
    $region14: #{mcvae_forward.1} parent=1 // pred_check
      _
    $region15: #{mcvae_forward.1} parent=1 // pred_check_branch
      %23 = sbr.rel (0) target = $region17
    $region16: #{mcvae_forward.1} parent=1 // pred_region
      _
    $region17: #{mcvae_forward.1} parent=1 // pred_fallthru
      _
    %v25 = vld [vmem:[%s0] sm:$0xff]
    %v26 = vld [vmem:[%s0 + $0x8] sm:$0xff]
    %v27 = vld [vmem:[%s0 + $0x10] sm:$0xff]
    %v28 = vpack.c.bf16 %v25, %v25
    %v29 = vpack.c.bf16 %v26, %v26
    %v30 = vpack.c.bf16 %v27, %v27
    %v31 = vld [vmem:[%s1] sm:$0xff]
    %v32 = vld [vmem:[%s1 + $0x8] sm:$0xff]
    %v33 = vld [vmem:[%s1 + $0x10] sm:$0xff]
    %v34 = vld [vmem:[%s1 + $0x18] sm:$0xff]
    %v35 = vld [vmem:[%s1 + $0x20] sm:$0xff]
    %v36 = vld [vmem:[%s1 + $0x28] sm:$0xff]
    %v37 = vpack.c.bf16 %v31, %v31
    %v38 = vpack.c.bf16 %v32, %v32
    %v39 = vpack.c.bf16 %v33, %v33
    %v40 = vpack.c.bf16 %v34, %v34
    %v41 = vpack.c.bf16 %v35, %v35
    %v42 = vpack.c.bf16 %v36, %v36
    %v45 = vunpack.c.l.b16 %v37
    %v46 = vunpack.c.l.b16 %v38
    %v47 = vpack.c.b16 %v46, %v45
    %49 = vmatpush.bf16.xpose.msra.mxu0 0
    %50 = vmatpush.bf16.xpose.msra.mxu0 0
    %51 = vmatpush.bf16.xpose.msra.mxu0 0
    %52 = vmatpush.bf16.xpose.msra.mxu0 0
    %53 = vmatpush.bf16.xpose.msra.mxu0 0
    %54 = vmatpush.bf16.xpose.msra.mxu0 0
    %55 = vmatpush.bf16.xpose.msra.mxu0 0
    %56 = vmatpush.bf16.xpose.msra.mxu0 %v47
    %57 = vmatmul.bf16.gmra.mxu0 %v28
    %v58 = vpop.f32.mrf.mxu0
    %v59 = vadd.f32 0.0, %v58
    %v60 = vpop.f32.mrf.mxu0
    %61 = vdwg.mxu0
    %v64 = vunpack.c.l.b16 %v39
    %v65 = vunpack.c.l.b16 %v40
    %v66 = vpack.c.b16 %v65, %v64
    %68 = vmatpush.bf16.xpose.msra.mxu0 0
    %69 = vmatpush.bf16.xpose.msra.mxu0 0
    %70 = vmatpush.bf16.xpose.msra.mxu0 0
    %71 = vmatpush.bf16.xpose.msra.mxu0 0
    %72 = vmatpush.bf16.xpose.msra.mxu0 0
    %73 = vmatpush.bf16.xpose.msra.mxu0 0
    %74 = vmatpush.bf16.xpose.msra.mxu0 0
    %75 = vmatpush.bf16.xpose.msra.mxu0 %v66
    %76 = vmatmul.bf16.gmra.mxu0 %v29
    %v77 = vpop.f32.mrf.mxu0
    %v78 = vadd.f32 0.0, %v77
    %v79 = vpop.f32.mrf.mxu0
    %80 = vdwg.mxu0
    %v83 = vunpack.c.l.b16 %v41
    %v84 = vunpack.c.l.b16 %v42
    %v85 = vpack.c.b16 %v84, %v83
    %87 = vmatpush.bf16.xpose.msra.mxu0 0
    %88 = vmatpush.bf16.xpose.msra.mxu0 0
    %89 = vmatpush.bf16.xpose.msra.mxu0 0
    %90 = vmatpush.bf16.xpose.msra.mxu0 0
    %91 = vmatpush.bf16.xpose.msra.mxu0 0
    %92 = vmatpush.bf16.xpose.msra.mxu0 0
    %93 = vmatpush.bf16.xpose.msra.mxu0 0
    %94 = vmatpush.bf16.xpose.msra.mxu0 %v85
    %95 = vmatmul.bf16.gmra.mxu0 %v30
    %v96 = vpop.f32.mrf.mxu0
    %v97 = vadd.f32 0.0, %v96
    %v98 = vpop.f32.mrf.mxu0
    %99 = vdwg.mxu0
    %v100 = vmul.f32 %v59, 0.5
    %v101 = vmul.f32 %v78, 0.5
    %v102 = vmul.f32 %v97, 0.5
    %v103 = vmul.f32 %v100, 1.442695
    %v104 = vpow.pop %v103
    %v105 = vmul.f32 %v101, 1.442695
    %v106 = vpow.pop %v105
    %v107 = vmul.f32 %v102, 1.442695
    %v108 = vpow.pop %v107
    %v109 = vld [vmem:[%s3] sm:$0xff]
    %v110 = vld [vmem:[%s3 + $0x8] sm:$0xff]
    %v111 = vld [vmem:[%s3 + $0x10] sm:$0xff]
    %115 = vrot.lane.b32.xlu0 %v109, 8
    %v116 = vpop.permute.xlu0 %115
    %117 = vrot.lane.b32.xlu0 %v110, 8
    %v118 = vpop.permute.xlu0 %117
    %119 = vrot.lane.b32.xlu0 %v111, 8
    %v120 = vpop.permute.xlu0 %119
    %v124 = vmul.f32 %v104, %v116
    %v125 = vmul.f32 %v106, %v118
    %v126 = vmul.f32 %v108, %v120
    %130 = vrot.lane.b32.xlu0 %v124, 120
    %v131 = vpop.permute.xlu0 %130
    %132 = vrot.lane.b32.xlu0 %v125, 120
    %v133 = vpop.permute.xlu0 %132
    %134 = vrot.lane.b32.xlu0 %v126, 120
    %v135 = vpop.permute.xlu0 %134
    %v139 = vadd.f32 %v59, %v131
    %v140 = vadd.f32 %v78, %v133
    %v141 = vadd.f32 %v97, %v135
    %vm142 = vcmask 64512
    %143 = vst.msk [vmem:[#allocation2] sm:$0xff] %vm142, %v59
    %144 = vst.msk [vmem:[#allocation2 + $0x8] sm:$0xff] %vm142, %v78
    %145 = vst.msk [vmem:[#allocation2 + $0x10] sm:$0xff] %vm142, %v97
    %149 = vrot.lane.b32.xlu0 %v59, 120
    %v150 = vpop.permute.xlu0 %149
    %151 = vrot.lane.b32.xlu0 %v78, 120
    %v152 = vpop.permute.xlu0 %151
    %153 = vrot.lane.b32.xlu0 %v97, 120
    %v154 = vpop.permute.xlu0 %153
    %158 = vst.msk [vmem:[#allocation4] sm:$0xff] %vm142, %v150
    %159 = vst.msk [vmem:[#allocation4 + $0x8] sm:$0xff] %vm142, %v152
    %160 = vst.msk [vmem:[#allocation4 + $0x10] sm:$0xff] %vm142, %v154
    %161 = vst.msk [vmem:[#allocation6] sm:$0xff] %vm142, %v139
    %162 = vst.msk [vmem:[#allocation6 + $0x8] sm:$0xff] %vm142, %v140
    %163 = vst.msk [vmem:[#allocation6 + $0x10] sm:$0xff] %vm142, %v141
    %v164 = vpack.c.bf16 %v139, %v139
    %v165 = vpack.c.bf16 %v140, %v140
    %v166 = vpack.c.bf16 %v141, %v141
    %v167 = vld [vmem:[%s2] sm:$0xff]
    %v168 = vld [vmem:[%s2 + $0x8] sm:$0xff]
    %v169 = vld [vmem:[%s2 + $0x10] sm:$0xff]
    %v170 = vld [vmem:[%s2 + $0x18] sm:$0xff]
    %v171 = vld [vmem:[%s2 + $0x20] sm:$0xff]
    %v172 = vld [vmem:[%s2 + $0x28] sm:$0xff]
    %v173 = vld [vmem:[%s2 + $0x30] sm:$0xff]
    %v174 = vld [vmem:[%s2 + $0x38] sm:$0xff]
    %v175 = vld [vmem:[%s2 + $0x40] sm:$0xff]
    %v176 = vld [vmem:[%s2 + $0x48] sm:$0xff]
    %v177 = vld [vmem:[%s2 + $0x50] sm:$0xff]
    %v178 = vld [vmem:[%s2 + $0x58] sm:$0xff]
    %v179 = vld [vmem:[%s2 + $0x60] sm:$0xff]
    %v180 = vld [vmem:[%s2 + $0x68] sm:$0xff]
    %v181 = vld [vmem:[%s2 + $0x70] sm:$0xff]
    %v182 = vld [vmem:[%s2 + $0x78] sm:$0xff]
    %v183 = vld [vmem:[%s2 + $0x80] sm:$0xff]
    %v184 = vld [vmem:[%s2 + $0x88] sm:$0xff]
    %v185 = vld [vmem:[%s2 + $0x90] sm:$0xff]
    %v186 = vld [vmem:[%s2 + $0x98] sm:$0xff]
    %v187 = vld [vmem:[%s2 + $0xa0] sm:$0xff]
    %v188 = vld [vmem:[%s2 + $0xa8] sm:$0xff]
    %v189 = vld [vmem:[%s2 + $0xb0] sm:$0xff]
    %v190 = vld [vmem:[%s2 + $0xb8] sm:$0xff]
    %v191 = vld [vmem:[%s2 + $0xc0] sm:$0xff]
    %v192 = vld [vmem:[%s2 + $0xc8] sm:$0xff]
    %v193 = vld [vmem:[%s2 + $0xd0] sm:$0xff]
    %v194 = vld [vmem:[%s2 + $0xd8] sm:$0xff]
    %v195 = vld [vmem:[%s2 + $0xe0] sm:$0xff]
    %v196 = vld [vmem:[%s2 + $0xe8] sm:$0xff]
    %v197 = vld [vmem:[%s2 + $0xf0] sm:$0xff]
    %v198 = vld [vmem:[%s2 + $0xf8] sm:$0xff]
    %v199 = vld [vmem:[%s2 + $0x100] sm:$0xff]
    %v200 = vld [vmem:[%s2 + $0x108] sm:$0xff]
    %v201 = vld [vmem:[%s2 + $0x110] sm:$0xff]
    %v202 = vld [vmem:[%s2 + $0x118] sm:$0xff]
    %v203 = vld [vmem:[%s2 + $0x120] sm:$0xff]
    %v204 = vld [vmem:[%s2 + $0x128] sm:$0xff]
    %v205 = vld [vmem:[%s2 + $0x130] sm:$0xff]
    %v206 = vld [vmem:[%s2 + $0x138] sm:$0xff]
    %v207 = vld [vmem:[%s2 + $0x140] sm:$0xff]
    %v208 = vld [vmem:[%s2 + $0x148] sm:$0xff]
    %v209 = vld [vmem:[%s2 + $0x150] sm:$0xff]
    %v210 = vld [vmem:[%s2 + $0x158] sm:$0xff]
    %v211 = vld [vmem:[%s2 + $0x160] sm:$0xff]
    %v212 = vld [vmem:[%s2 + $0x168] sm:$0xff]
    %v213 = vld [vmem:[%s2 + $0x170] sm:$0xff]
    %v214 = vld [vmem:[%s2 + $0x178] sm:$0xff]
    %v215 = vpack.c.bf16 %v167, %v167
    %v216 = vpack.c.bf16 %v168, %v168
    %v217 = vpack.c.bf16 %v169, %v169
    %v218 = vpack.c.bf16 %v170, %v170
    %v219 = vpack.c.bf16 %v171, %v171
    %v220 = vpack.c.bf16 %v172, %v172
    %v221 = vpack.c.bf16 %v173, %v173
    %v222 = vpack.c.bf16 %v174, %v174
    %v223 = vpack.c.bf16 %v175, %v175
    %v224 = vpack.c.bf16 %v176, %v176
    %v225 = vpack.c.bf16 %v177, %v177
    %v226 = vpack.c.bf16 %v178, %v178
    %v227 = vpack.c.bf16 %v179, %v179
    %v228 = vpack.c.bf16 %v180, %v180
    %v229 = vpack.c.bf16 %v181, %v181
    %v230 = vpack.c.bf16 %v182, %v182
    %v231 = vpack.c.bf16 %v183, %v183
    %v232 = vpack.c.bf16 %v184, %v184
    %v233 = vpack.c.bf16 %v185, %v185
    %v234 = vpack.c.bf16 %v186, %v186
    %v235 = vpack.c.bf16 %v187, %v187
    %v236 = vpack.c.bf16 %v188, %v188
    %v237 = vpack.c.bf16 %v189, %v189
    %v238 = vpack.c.bf16 %v190, %v190
    %v239 = vpack.c.bf16 %v191, %v191
    %v240 = vpack.c.bf16 %v192, %v192
    %v241 = vpack.c.bf16 %v193, %v193
    %v242 = vpack.c.bf16 %v194, %v194
    %v243 = vpack.c.bf16 %v195, %v195
    %v244 = vpack.c.bf16 %v196, %v196
    %v245 = vpack.c.bf16 %v197, %v197
    %v246 = vpack.c.bf16 %v198, %v198
    %v247 = vpack.c.bf16 %v199, %v199
    %v248 = vpack.c.bf16 %v200, %v200
    %v249 = vpack.c.bf16 %v201, %v201
    %v250 = vpack.c.bf16 %v202, %v202
    %v251 = vpack.c.bf16 %v203, %v203
    %v252 = vpack.c.bf16 %v204, %v204
    %v253 = vpack.c.bf16 %v205, %v205
    %v254 = vpack.c.bf16 %v206, %v206
    %v255 = vpack.c.bf16 %v207, %v207
    %v256 = vpack.c.bf16 %v208, %v208
    %v257 = vpack.c.bf16 %v209, %v209
    %v258 = vpack.c.bf16 %v210, %v210
    %v259 = vpack.c.bf16 %v211, %v211
    %v260 = vpack.c.bf16 %v212, %v212
    %v261 = vpack.c.bf16 %v213, %v213
    %v262 = vpack.c.bf16 %v214, %v214
    %v279 = vunpack.c.l.b16 %v215
    %v280 = vunpack.c.l.b16 %v216
    %v281 = vunpack.c.l.b16 %v217
    %v282 = vunpack.c.l.b16 %v218
    %v283 = vunpack.c.l.b16 %v219
    %v284 = vunpack.c.l.b16 %v220
    %v285 = vunpack.c.l.b16 %v221
    %v286 = vunpack.c.l.b16 %v222
    %v287 = vunpack.c.l.b16 %v223
    %v288 = vunpack.c.l.b16 %v224
    %v289 = vunpack.c.l.b16 %v225
    %v290 = vunpack.c.l.b16 %v226
    %v291 = vunpack.c.l.b16 %v227
    %v292 = vunpack.c.l.b16 %v228
    %v293 = vunpack.c.l.b16 %v229
    %v294 = vunpack.c.l.b16 %v230
    %v295 = vpack.c.b16 %v280, %v279
    %v296 = vpack.c.b16 %v282, %v281
    %v297 = vpack.c.b16 %v284, %v283
    %v298 = vpack.c.b16 %v286, %v285
    %v299 = vpack.c.b16 %v288, %v287
    %v300 = vpack.c.b16 %v290, %v289
    %v301 = vpack.c.b16 %v292, %v291
    %v302 = vpack.c.b16 %v294, %v293
    %v304 = vsel %vm142, %v164, 0
    %v307 = vsel %vm142, %v295, 0
    %v310 = vsel %vm142, %v296, 0
    %v313 = vsel %vm142, %v297, 0
    %v316 = vsel %vm142, %v298, 0
    %v319 = vsel %vm142, %v299, 0
    %v322 = vsel %vm142, %v300, 0
    %v325 = vsel %vm142, %v301, 0
    %v328 = vsel %vm142, %v302, 0
    %330 = vmatpush.bf16.xpose.msra.mxu0 %v328
    %331 = vmatpush.bf16.xpose.msra.mxu0 %v325
    %332 = vmatpush.bf16.xpose.msra.mxu0 %v322
    %333 = vmatpush.bf16.xpose.msra.mxu0 %v319
    %334 = vmatpush.bf16.xpose.msra.mxu0 %v316
    %335 = vmatpush.bf16.xpose.msra.mxu0 %v313
    %336 = vmatpush.bf16.xpose.msra.mxu0 %v310
    %337 = vmatpush.bf16.xpose.msra.mxu0 %v307
    %338 = vmatmul.bf16.gmra.mxu0 %v304
    %v339 = vpop.f32.mrf.mxu0
    %v340 = vadd.f32 0.0, %v339
    %v341 = vpop.f32.mrf.mxu0
    %342 = vdwg.mxu0
    %343 = vst [vmem:[#allocation7] sm:$0xff] %v340
    %v345 = vsel %vm142, %v165, 0
    %347 = vmatpush.bf16.xpose.msra.mxu0 %v328
    %348 = vmatpush.bf16.xpose.msra.mxu0 %v325
    %349 = vmatpush.bf16.xpose.msra.mxu0 %v322
    %350 = vmatpush.bf16.xpose.msra.mxu0 %v319
    %351 = vmatpush.bf16.xpose.msra.mxu0 %v316
    %352 = vmatpush.bf16.xpose.msra.mxu0 %v313
    %353 = vmatpush.bf16.xpose.msra.mxu0 %v310
    %354 = vmatpush.bf16.xpose.msra.mxu0 %v307
    %355 = vmatmul.bf16.gmra.mxu0 %v345
    %v356 = vpop.f32.mrf.mxu0
    %v357 = vadd.f32 0.0, %v356
    %v358 = vpop.f32.mrf.mxu0
    %359 = vdwg.mxu0
    %s360 = scalar_lea.vmem [#allocation7], 8
    %361 = vst [vmem:[%s360] sm:$0xff] %v357
    %v363 = vsel %vm142, %v166, 0
    %365 = vmatpush.bf16.xpose.msra.mxu0 %v328
    %366 = vmatpush.bf16.xpose.msra.mxu0 %v325
    %367 = vmatpush.bf16.xpose.msra.mxu0 %v322
    %368 = vmatpush.bf16.xpose.msra.mxu0 %v319
    %369 = vmatpush.bf16.xpose.msra.mxu0 %v316
    %370 = vmatpush.bf16.xpose.msra.mxu0 %v313
    %371 = vmatpush.bf16.xpose.msra.mxu0 %v310
    %372 = vmatpush.bf16.xpose.msra.mxu0 %v307
    %373 = vmatmul.bf16.gmra.mxu0 %v363
    %v374 = vpop.f32.mrf.mxu0
    %v375 = vadd.f32 0.0, %v374
    %v376 = vpop.f32.mrf.mxu0
    %377 = vdwg.mxu0
    %s378 = scalar_lea.vmem [#allocation7], 16
    %379 = vst [vmem:[%s378] sm:$0xff] %v375
    %v396 = vunpack.c.l.b16 %v231
    %v397 = vunpack.c.l.b16 %v232
    %v398 = vunpack.c.l.b16 %v233
    %v399 = vunpack.c.l.b16 %v234
    %v400 = vunpack.c.l.b16 %v235
    %v401 = vunpack.c.l.b16 %v236
    %v402 = vunpack.c.l.b16 %v237
    %v403 = vunpack.c.l.b16 %v238
    %v404 = vunpack.c.l.b16 %v239
    %v405 = vunpack.c.l.b16 %v240
    %v406 = vunpack.c.l.b16 %v241
    %v407 = vunpack.c.l.b16 %v242
    %v408 = vunpack.c.l.b16 %v243
    %v409 = vunpack.c.l.b16 %v244
    %v410 = vunpack.c.l.b16 %v245
    %v411 = vunpack.c.l.b16 %v246
    %v412 = vpack.c.b16 %v397, %v396
    %v413 = vpack.c.b16 %v399, %v398
    %v414 = vpack.c.b16 %v401, %v400
    %v415 = vpack.c.b16 %v403, %v402
    %v416 = vpack.c.b16 %v405, %v404
    %v417 = vpack.c.b16 %v407, %v406
    %v418 = vpack.c.b16 %v409, %v408
    %v419 = vpack.c.b16 %v411, %v410
    %v421 = vsel %vm142, %v412, 0
    %v424 = vsel %vm142, %v413, 0
    %v427 = vsel %vm142, %v414, 0
    %v430 = vsel %vm142, %v415, 0
    %v433 = vsel %vm142, %v416, 0
    %v436 = vsel %vm142, %v417, 0
    %v439 = vsel %vm142, %v418, 0
    %v442 = vsel %vm142, %v419, 0
    %444 = vmatpush.bf16.xpose.msra.mxu0 %v442
    %445 = vmatpush.bf16.xpose.msra.mxu0 %v439
    %446 = vmatpush.bf16.xpose.msra.mxu0 %v436
    %447 = vmatpush.bf16.xpose.msra.mxu0 %v433
    %448 = vmatpush.bf16.xpose.msra.mxu0 %v430
    %449 = vmatpush.bf16.xpose.msra.mxu0 %v427
    %450 = vmatpush.bf16.xpose.msra.mxu0 %v424
    %451 = vmatpush.bf16.xpose.msra.mxu0 %v421
    %452 = vmatmul.bf16.gmra.mxu0 %v304
    %v453 = vpop.f32.mrf.mxu0
    %v454 = vadd.f32 0.0, %v453
    %v455 = vpop.f32.mrf.mxu0
    %456 = vdwg.mxu0
    %s457 = scalar_lea.vmem [#allocation7], 24
    %458 = vst [vmem:[%s457] sm:$0xff] %v454
    %459 = vmatpush.bf16.xpose.msra.mxu0 %v442
    %460 = vmatpush.bf16.xpose.msra.mxu0 %v439
    %461 = vmatpush.bf16.xpose.msra.mxu0 %v436
    %462 = vmatpush.bf16.xpose.msra.mxu0 %v433
    %463 = vmatpush.bf16.xpose.msra.mxu0 %v430
    %464 = vmatpush.bf16.xpose.msra.mxu0 %v427
    %465 = vmatpush.bf16.xpose.msra.mxu0 %v424
    %466 = vmatpush.bf16.xpose.msra.mxu0 %v421
    %467 = vmatmul.bf16.gmra.mxu0 %v345
    %v468 = vpop.f32.mrf.mxu0
    %v469 = vadd.f32 0.0, %v468
    %v470 = vpop.f32.mrf.mxu0
    %471 = vdwg.mxu0
    %s472 = scalar_lea.vmem [#allocation7], 32
    %473 = vst [vmem:[%s472] sm:$0xff] %v469
    %474 = vmatpush.bf16.xpose.msra.mxu0 %v442
    %475 = vmatpush.bf16.xpose.msra.mxu0 %v439
    %476 = vmatpush.bf16.xpose.msra.mxu0 %v436
    %477 = vmatpush.bf16.xpose.msra.mxu0 %v433
    %478 = vmatpush.bf16.xpose.msra.mxu0 %v430
    %479 = vmatpush.bf16.xpose.msra.mxu0 %v427
    %480 = vmatpush.bf16.xpose.msra.mxu0 %v424
    %481 = vmatpush.bf16.xpose.msra.mxu0 %v421
    %482 = vmatmul.bf16.gmra.mxu0 %v363
    %v483 = vpop.f32.mrf.mxu0
    %v484 = vadd.f32 0.0, %v483
    %v485 = vpop.f32.mrf.mxu0
    %486 = vdwg.mxu0
    %s487 = scalar_lea.vmem [#allocation7], 40
    %488 = vst [vmem:[%s487] sm:$0xff] %v484
    %v505 = vunpack.c.l.b16 %v247
    %v506 = vunpack.c.l.b16 %v248
    %v507 = vunpack.c.l.b16 %v249
    %v508 = vunpack.c.l.b16 %v250
    %v509 = vunpack.c.l.b16 %v251
    %v510 = vunpack.c.l.b16 %v252
    %v511 = vunpack.c.l.b16 %v253
    %v512 = vunpack.c.l.b16 %v254
    %v513 = vunpack.c.l.b16 %v255
    %v514 = vunpack.c.l.b16 %v256
    %v515 = vunpack.c.l.b16 %v257
    %v516 = vunpack.c.l.b16 %v258
    %v517 = vunpack.c.l.b16 %v259
    %v518 = vunpack.c.l.b16 %v260
    %v519 = vunpack.c.l.b16 %v261
    %v520 = vunpack.c.l.b16 %v262
    %v521 = vpack.c.b16 %v506, %v505
    %v522 = vpack.c.b16 %v508, %v507
    %v523 = vpack.c.b16 %v510, %v509
    %v524 = vpack.c.b16 %v512, %v511
    %v525 = vpack.c.b16 %v514, %v513
    %v526 = vpack.c.b16 %v516, %v515
    %v527 = vpack.c.b16 %v518, %v517
    %v528 = vpack.c.b16 %v520, %v519
    %v530 = vsel %vm142, %v521, 0
    %v533 = vsel %vm142, %v522, 0
    %v536 = vsel %vm142, %v523, 0
    %v539 = vsel %vm142, %v524, 0
    %v542 = vsel %vm142, %v525, 0
    %v545 = vsel %vm142, %v526, 0
    %v548 = vsel %vm142, %v527, 0
    %v551 = vsel %vm142, %v528, 0
    %553 = vmatpush.bf16.xpose.msra.mxu0 %v551
    %554 = vmatpush.bf16.xpose.msra.mxu0 %v548
    %555 = vmatpush.bf16.xpose.msra.mxu0 %v545
    %556 = vmatpush.bf16.xpose.msra.mxu0 %v542
    %557 = vmatpush.bf16.xpose.msra.mxu0 %v539
    %558 = vmatpush.bf16.xpose.msra.mxu0 %v536
    %559 = vmatpush.bf16.xpose.msra.mxu0 %v533
    %560 = vmatpush.bf16.xpose.msra.mxu0 %v530
    %561 = vmatmul.bf16.gmra.mxu0 %v304
    %v562 = vpop.f32.mrf.mxu0
    %v563 = vadd.f32 0.0, %v562
    %v564 = vpop.f32.mrf.mxu0
    %565 = vdwg.mxu0
    %s566 = scalar_lea.vmem [#allocation7], 48
    %567 = vst [vmem:[%s566] sm:$0xff] %v563
    %568 = vmatpush.bf16.xpose.msra.mxu0 %v551
    %569 = vmatpush.bf16.xpose.msra.mxu0 %v548
    %570 = vmatpush.bf16.xpose.msra.mxu0 %v545
    %571 = vmatpush.bf16.xpose.msra.mxu0 %v542
    %572 = vmatpush.bf16.xpose.msra.mxu0 %v539
    %573 = vmatpush.bf16.xpose.msra.mxu0 %v536
    %574 = vmatpush.bf16.xpose.msra.mxu0 %v533
    %575 = vmatpush.bf16.xpose.msra.mxu0 %v530
    %576 = vmatmul.bf16.gmra.mxu0 %v345
    %v577 = vpop.f32.mrf.mxu0
    %v578 = vadd.f32 0.0, %v577
    %v579 = vpop.f32.mrf.mxu0
    %580 = vdwg.mxu0
    %s581 = scalar_lea.vmem [#allocation7], 56
    %582 = vst [vmem:[%s581] sm:$0xff] %v578
    %583 = vmatpush.bf16.xpose.msra.mxu0 %v551
    %584 = vmatpush.bf16.xpose.msra.mxu0 %v548
    %585 = vmatpush.bf16.xpose.msra.mxu0 %v545
    %586 = vmatpush.bf16.xpose.msra.mxu0 %v542
    %587 = vmatpush.bf16.xpose.msra.mxu0 %v539
    %588 = vmatpush.bf16.xpose.msra.mxu0 %v536
    %589 = vmatpush.bf16.xpose.msra.mxu0 %v533
    %590 = vmatpush.bf16.xpose.msra.mxu0 %v530
    %591 = vmatmul.bf16.gmra.mxu0 %v363
    %v592 = vpop.f32.mrf.mxu0
    %v593 = vadd.f32 0.0, %v592
    %v594 = vpop.f32.mrf.mxu0
    %595 = vdwg.mxu0
    %s596 = scalar_lea.vmem [#allocation7], 64
    %597 = vst [vmem:[%s596] sm:$0xff] %v593
    // Predicated region
    $region18: #{mcvae_forward.1} parent=1 // pred_check
      _
    $region19: #{mcvae_forward.1} parent=1 // pred_check_branch
      %599 = sbr.rel (0) target = $region21
    $region20: #{mcvae_forward.1} parent=1 // pred_region
      %601 = vsyncadd [#allocation3], 0
      %s602 = sshll.u32 [#allocation2], 4
      %s603 = int_to_ptr.vmem [resolvable:$true] %s602
      %s604 = sshll.u32 %s4, 4
      %s605 = int_to_ptr.hbm [resolvable:$true] %s604
      %610 = dma.vmem_to_hbm [thread:$0]  %s603, 384, %s605, [#allocation3], 128, 128, 8
    $region21: #{mcvae_forward.1} parent=1 // pred_fallthru
      _
    // Predicated region
    $region22: #{mcvae_forward.1} parent=1 // pred_check
      _
    $region23: #{mcvae_forward.1} parent=1 // pred_check_branch
      %612 = sbr.rel (0) target = $region25
    $region24: #{mcvae_forward.1} parent=1 // pred_region
      %614 = vsyncadd [#allocation5], 0
      %s615 = sshll.u32 [#allocation4], 4
      %s616 = int_to_ptr.vmem [resolvable:$true] %s615
      %s617 = sshll.u32 %s5, 4
      %s618 = int_to_ptr.hbm [resolvable:$true] %s617
      %623 = dma.vmem_to_hbm [thread:$0]  %s616, 384, %s618, [#allocation5], 128, 128, 8
    $region25: #{mcvae_forward.1} parent=1 // pred_fallthru
      _
    // Predicated region
    $region26: #{mcvae_forward.1} parent=1 // pred_check
      _
    $region27: #{mcvae_forward.1} parent=1 // pred_check_branch
      %625 = sbr.rel (0) target = $region29
    $region28: #{mcvae_forward.1} parent=1 // pred_region
      %627 = vsyncadd [#allocation5], 0
      %s628 = sshll.u32 [#allocation6], 4
      %s629 = int_to_ptr.vmem [resolvable:$true] %s628
      %s630 = sshll.u32 %s6, 4
      %s631 = int_to_ptr.hbm [resolvable:$true] %s630
      %636 = dma.vmem_to_hbm [thread:$0]  %s629, 384, %s631, [#allocation5], 128, 128, 8
    $region29: #{mcvae_forward.1} parent=1 // pred_fallthru
      _
    // Predicated region
    $region30: #{mcvae_forward.1} parent=1 // pred_check
      _
    $region31: #{mcvae_forward.1} parent=1 // pred_check_branch
      %638 = sbr.rel (0) target = $region33
    $region32: #{mcvae_forward.1} parent=1 // pred_region
      %640 = vsyncadd [#allocation8], 0
      %s641 = sshll.u32 [#allocation7], 4
      %s642 = int_to_ptr.vmem [resolvable:$true] %s641
      %s643 = sshll.u32 %s7, 4
      %s644 = int_to_ptr.hbm [resolvable:$true] %s643
      %649 = dma.vmem_to_hbm [thread:$0]  %s642, 1152, %s644, [#allocation8], 128, 128, 8
    $region33: #{mcvae_forward.1} parent=1 // pred_fallthru
      _
    // Predicated region
    $region34: #{mcvae_forward.1} parent=1 // pred_check
      _
    $region35: #{mcvae_forward.1} parent=1 // pred_check_branch
      %651 = sbr.rel (0) target = $region37
    $region36: #{mcvae_forward.1} parent=1 // pred_region
      %653 = dma.done [#allocation3], 384
    $region37: #{mcvae_forward.1} parent=1 // pred_fallthru
      _
    // Predicated region
    $region38: #{mcvae_forward.1} parent=1 // pred_check
      _
    $region39: #{mcvae_forward.1} parent=1 // pred_check_branch
      %655 = sbr.rel (0) target = $region41
    $region40: #{mcvae_forward.1} parent=1 // pred_region
      %657 = dma.done [#allocation5], 384
    $region41: #{mcvae_forward.1} parent=1 // pred_fallthru
      _
    // Predicated region
    $region42: #{mcvae_forward.1} parent=1 // pred_check
      _
    $region43: #{mcvae_forward.1} parent=1 // pred_check_branch
      %659 = sbr.rel (0) target = $region45
    $region44: #{mcvae_forward.1} parent=1 // pred_region
      %661 = dma.done [#allocation5], 384
    $region45: #{mcvae_forward.1} parent=1 // pred_fallthru
      _
    // Predicated region
    $region46: #{mcvae_forward.1} parent=1 // pred_check
      _
    $region47: #{mcvae_forward.1} parent=1 // pred_check_branch
      %663 = sbr.rel (0) target = $region49
    $region48: #{mcvae_forward.1} parent=1 // pred_region
      %665 = dma.done [#allocation8], 1152
    $region49: #{mcvae_forward.1} parent=1 // pred_fallthru
      _
    %666 = vsyncpa [#allocation3], 1
    %667 = vsyncpa [#allocation5], 1
    %668 = vsyncpa [#allocation8], 1

</llo_original>
